<compile_context>
chip_gen: v6e
topology: v6e:2x2x1
jax: 0.10.0
libtpu: 0.0.40
codegen_flags: <defaults>
</compile_context>

<pallas_src>
import functools

import jax
import jax.numpy as jnp
from jax.experimental import pallas as pl
from jax.experimental.pallas import tpu as pltpu


def _copy_kernel(x_ref, o_ref):
    # Dense (TR, TL) VMEM tile passthrough; the chomp itself happens in the
    # grid/BlockSpecs (the dropped tail is never read from HBM).
    o_ref[...] = x_ref[...]


def _round_up(x: int, m: int) -> int:
    return ((x + m - 1) // m) * m


def _tpu_budgets() -> tuple[int, int]:
    """(max_tile_bytes_per_buffer, vmem_limit_bytes), adapted to the chip."""
    try:
        vmem_phys = int(getattr(pltpu.get_tpu_info(), "vmem_capacity_bytes",
                                64 << 20))
    except Exception:
        vmem_phys = 64 << 20  # conservative: assume the smallest (v7x-like) VMEM
    if vmem_phys >= (100 << 20):
        # v5e / v6e: 128 MiB physical VMEM -> 8 MiB tiles, 64 MiB scoped budget.
        return 8 << 20, 64 << 20
    # v7x: 64 MiB physical VMEM, fastest HBM -> 6 MiB tiles, 32 MiB scoped budget
    # (double-buffered in + out = 4 x 6 MiB = 24 MiB, fits comfortably).
    return 6 << 20, 32 << 20


def _pick_tiles(rows: int, l_out: int, itemsize: int,
                max_tile_bytes: int) -> tuple[int, int]:
    """Pick (TR, TL): sublane/lane-aligned tiles within the per-buffer budget.

    Lane (time) axis is maximized first (better strided-DMA contiguity and a
    lane-dense output); rows are then capped by the byte budget. Finally the
    grid is forced to have >= 2 blocks when possible so both v7x TensorCores
    get work.
    """
    sub = {4: 8, 2: 16, 1: 32}.get(itemsize, 8)       # sublane multiple per dtype
    tl = min(_round_up(l_out, 128), 8192)             # lane axis: multiple of 128
    tr_cap = max(sub, (max_tile_bytes // (tl * itemsize)) // sub * sub)
    tr = min(_round_up(rows, sub), tr_cap)            # sublane axis: multiple of sub

    # Guarantee >= 2 grid blocks for megacore sharding whenever the data allows.
    while pl.cdiv(rows, tr) * pl.cdiv(l_out, tl) < 2:
        if tr > sub:
            tr = max(sub, _round_up(tr // 2, sub))
        elif tl > 128:
            tl = max(128, _round_up(tl // 2, 128))
        else:
            break
    return tr, tl


@functools.partial(jax.jit, static_argnames=("chomp_size",))
def chomp1d(x: jax.Array, chomp_size: int) -> jax.Array:
    """Equivalent of Chomp1d(chomp_size).forward(x) for x of shape (N, C, L).

    NOTE: PyTorch's `x[:, :, :-0]` would return an empty tensor; we require a
    real chomp (0 < chomp_size < L), which is the TCN use case.
    """
    assert x.ndim == 3, "expected (N, C, L)"
    n, c, l = x.shape
    assert 0 < chomp_size < l, "chomp_size must be in (0, L)"
    l_out = l - chomp_size

    rows = n * c
    x2d = x.reshape(rows, l)  # flatten (N, C) -> dense 2D (metadata-only reshape)

    itemsize = jnp.dtype(x.dtype).itemsize
    max_tile_bytes, vmem_limit = _tpu_budgets()
    tr, tl = _pick_tiles(rows, l_out, itemsize, max_tile_bytes)
    grid = (pl.cdiv(rows, tr), pl.cdiv(l_out, tl))

    out2d = pl.pallas_call(
        _copy_kernel,
        out_shape=jax.ShapeDtypeStruct((rows, l_out), x.dtype),
        grid_spec=pltpu.PrefetchScalarGridSpec(
            num_scalar_prefetch=0,
            grid=grid,
            # Input blocks only cover the first L_out time-steps: the chomped
            # tail is never DMA'd. Edge blocks are padded/masked by Pallas.
            in_specs=[pl.BlockSpec((tr, tl), lambda r, k: (r, k))],
            out_specs=pl.BlockSpec((tr, tl), lambda r, k: (r, k)),
        ),
        compiler_params=pltpu.CompilerParams(
            dimension_semantics=("parallel", "parallel"),
            vmem_limit_bytes=vmem_limit,
        ),
        cost_estimate=pl.CostEstimate(
            flops=0,
            transcendentals=0,
            bytes_accessed=2 * rows * l_out * itemsize,
        ),
    )(x2d)

    return out2d.reshape(n, c, l_out)


if __name__ == "__main__":
    key = jax.random.PRNGKey(0)
    N, C, L = 2, 4, 16
    chomp_size = 3  # e.g. padding = (kernel_size - 1) * dilation in a TCN block

    x = jax.random.normal(key, (N, C, L), dtype=jnp.float32)
    y = jax.block_until_ready(chomp1d(x, chomp_size))

    assert y.shape == (N, C, L - chomp_size)
    assert jnp.array_equal(y, x[:, :, :-chomp_size])

    # Extra coverage for masked edge blocks and dtype packing:
    #  - rows not a multiple of the sublane tile, l_out % 128 != 0, bf16.
    for shape, chomp, dt in (((3, 5, 200), 7, jnp.float32),
                             ((2, 3, 50), 5, jnp.bfloat16)):
        xe = jax.random.normal(jax.random.PRNGKey(1), shape,
                               dtype=jnp.float32).astype(dt)
        ye = jax.block_until_ready(chomp1d(xe, chomp))
        assert ye.shape == (shape[0], shape[1], shape[2] - chomp)
        assert jnp.array_equal(ye, xe[:, :, :-chomp])

    print("KERNEL_OK")
</pallas_src>

<mosaic_0001>
module attributes {stable_mosaic.version = 11 : i64} {
  func.func @_copy_kernel(%arg0: i32, %arg1: i32, %arg2: memref<8x128xf32, #tpu.memory_space<vmem>>, %arg3: memref<8x128xf32, #tpu.memory_space<vmem>>) attributes {dimension_semantics = [#tpu.dimension_semantics<parallel>, #tpu.dimension_semantics<parallel>], iteration_bounds = array<i64: 1, 1>, scalar_prefetch = 0 : i64, scratch_operands = 0 : i64, tpu.core_type = #tpu.core_type<tc>, window_params = [{transform_indices = @transform_0, window_bounds = array<i64: 8, 128>}, {transform_indices = @transform_1, window_bounds = array<i64: 8, 128>}]} {
    %c0 = arith.constant 0 : index
    %c0_0 = arith.constant 0 : index
    %0 = vector.load %arg2[%c0, %c0_0] : memref<8x128xf32, #tpu.memory_space<vmem>>, vector<8x128xf32>
    %c0_1 = arith.constant 0 : index
    %c0_2 = arith.constant 0 : index
    %1 = vector.load %arg3[%c0_1, %c0_2] : memref<8x128xf32, #tpu.memory_space<vmem>>, vector<8x128xf32>
    tpu.vector_store %arg3[%c0_1, %c0_2], %0 {strides = array<i32>} : memref<8x128xf32, #tpu.memory_space<vmem>>, vector<8x128xf32>,
    return
  }
  func.func @transform_0(%arg0: i32, %arg1: i32) -> (i32, i32) {
    %c0_i32 = arith.constant 0 : i32
    return %arg0, %arg1 : i32, i32
  }
  func.func @transform_1(%arg0: i32, %arg1: i32) -> (i32, i32) {
    %c0_i32 = arith.constant 0 : i32
    return %arg0, %arg1 : i32, i32
  }
}

</mosaic_0001>

<llo_original>
// kernel: chomp1d.1
$region0: #{chomp1d.1}
  #allocation0 [shape = 'u32[]', space=smem, size = 0x4, offset = 0x4, fixed_abs, tag = 'smem constant byte address 0x4 - core index']
  #allocation1 [shape = 'u32[144,128]{1,0:T(1,128)}', space=vmem, size = 0x12000, scoped, tag = 'internal scratch']
  %s0 = inlined_call_operand.hbm [shape: f32[8,16], index: 0, kind: input, shape index: {}]
  %s1 = inlined_call_operand.hbm [shape: f32[8,13], index: 1, kind: output, shape index: {}]
  %s2 = sld [smem:[#allocation0]]
  $region18: #{chomp1d.1} parent=0
    _
  %s4 = ssub.s32 1, %s2
  %s5 = scalar_select 0, %s4, %s2
  $region1: #{chomp1d.1} parent=0
    #allocation2 [shape = 'u8[4096]{0}', space=vmem, size = 0x1000, scoped, tag = 'input window, operand 0, single buffered']
    #allocation3 [shape = 's32[1]{0}', space=sflag, size = 0x4, scoped, tag = 'scoped memory for chomp1d.1']
    #allocation4 [shape = 's32[1]{0}', space=sflag, size = 0x4, scoped, tag = 'scoped memory for chomp1d.1']
    #allocation5 [shape = 'u8[4096]{0}', space=vmem, size = 0x1000, scoped, tag = 'output window, operand 0, single buffered']
    %6 = vsyncpa [#allocation3], 0
    %7 = vsyncpa [#allocation4], 0
    // Predicated region
    $region2: #{chomp1d.1} parent=1 // pred_check
      _
    $region3: #{chomp1d.1} parent=1 // pred_check_branch
      %9 = sbr.rel (0) target = $region5
    $region4: #{chomp1d.1} parent=1 // pred_region
      %s11 = ssub.s32 128, 128
      %12 = vsyncadd [#allocation3], %s11
      %s14 = sshll.u32 [#allocation2], 4
      %s15 = int_to_ptr.vmem [resolvable:$true] %s14
      %17 = dma.hbm_to_vmem [thread:$0]  %s0, 128, %s15, [#allocation3]
    $region5: #{chomp1d.1} parent=1 // pred_fallthru
      _
    // Predicated region
    $region6: #{chomp1d.1} parent=1 // pred_check
      _
    $region7: #{chomp1d.1} parent=1 // pred_check_branch
      %19 = sbr.rel (0) target = $region9
    $region8: #{chomp1d.1} parent=1 // pred_region
      %20 = dma.done [#allocation3], 128
    $region9: #{chomp1d.1} parent=1 // pred_fallthru
      _
    %v21 = vld [vmem:[#allocation2] sm:$0xff]
    %22 = vst [vmem:[#allocation5] sm:$0xff] %v21
    // Predicated region
    $region10: #{chomp1d.1} parent=1 // pred_check
      _
    $region11: #{chomp1d.1} parent=1 // pred_check_branch
      %24 = sbr.rel (0) target = $region13
    $region12: #{chomp1d.1} parent=1 // pred_region
      %s26 = ssub.s32 128, 128
      %27 = vsyncadd [#allocation4], %s26
      %s29 = sshll.u32 [#allocation5], 4
      %s30 = int_to_ptr.vmem [resolvable:$true] %s29
      %32 = dma.vmem_to_hbm [thread:$0]  %s30, 128, %s1, [#allocation4]
    $region13: #{chomp1d.1} parent=1 // pred_fallthru
      _
    // Predicated region
    $region14: #{chomp1d.1} parent=1 // pred_check
      _
    $region15: #{chomp1d.1} parent=1 // pred_check_branch
      %34 = sbr.rel (0) target = $region17
    $region16: #{chomp1d.1} parent=1 // pred_region
      %35 = dma.done [#allocation4], 128
    $region17: #{chomp1d.1} parent=1 // pred_fallthru
      _
    %36 = vsyncpa [#allocation3], 1
    %37 = vsyncpa [#allocation4], 1

</llo_original>
